<compile_context>
chip_gen: v6e
topology: v6e:2x2x1
jax: 0.10.0
libtpu: 0.0.40
codegen_flags: <defaults>
</compile_context>

<pallas_src>
import numpy as np
import jax
import jax.numpy as jnp
from jax.experimental import pallas as pl
from jax.experimental.pallas import tpu as pltpu

# ---- fixed dimensions baked into the PyTorch module -------------------------
FV_DIM = 128
N_CLINICAL = 38
N_PIXEL = 6 * 6                       # 36
N_NODES = N_CLINICAL + N_PIXEL        # 74
N_OUT = 1                             # binary classification head
NC_PAD = 40                           # clinical rows padded to a multiple of 8
NI_PAD = 40                           # image rows padded to a multiple of 8
N_PAD = NC_PAD + NI_PAD               # 80 padded nodes per item
DEG_CLINICAL = 1.0 + N_PIXEL          # self edge + 36 image neighbours  = 37
DEG_IMAGE = 1.0 + N_CLINICAL          # self edge + 38 clinical neighbours = 39


# ---- graph construction (faithful port of Network.get_edges, used by the
# ---- pure-JAX reference / structural check only) -----------------------------
def get_edges(n_clinical, n_nodes):
    node_ids = np.expand_dims(np.arange(n_nodes, dtype=int), 0)
    self_edges = np.concatenate((node_ids, node_ids), 0)
    c_array_asc = np.expand_dims(np.arange(n_clinical), 0)
    all_edges = self_edges[:]
    for i in range(n_clinical, n_nodes):
        i_array = np.expand_dims(np.array([i] * n_clinical), 0)
        inter_edges_ic = np.concatenate((i_array, c_array_asc), 0)
        inter_edges_ci = np.concatenate((c_array_asc, i_array), 0)
        inter_edges_i = np.concatenate((inter_edges_ic, inter_edges_ci), 1)
        all_edges = np.concatenate((all_edges, inter_edges_i), 1)
    return all_edges                                   # [2, 2810]


def build_normalized_adjacency(edges, n_nodes):
    """Dense, row-normalized (mean-aggregation) adjacency incl. self-loops."""
    a = np.zeros((n_nodes, n_nodes), np.float32)
    src, dst = edges[0], edges[1]
    a[dst, src] = 1.0                                  # message src -> dst
    deg = np.maximum(a.sum(axis=1, keepdims=True), 1.0)
    return (a / deg).astype(np.float32)


# ---- fused Pallas kernel ------------------------------------------------------
# TODO(synk): RMRM's definition is not provided in the reference source; it is
# implemented as one GCN-style layer (mean neighbor aggregation, linear, ReLU).
# TODO(synk): OutputBlock's definition is not provided; implemented as a single
# Linear(fv_dim * (n_clinical + 1) -> 1), fused here as an in-kernel reduction.
def make_fused_kernel(bt):
    inv_dc = 1.0 / DEG_CLINICAL
    inv_di = 1.0 / DEG_IMAGE

    def kernel(c_ref, i_ref, w_ref, bg_ref, wo_ref, o_ref, xs_ref):
        # ---- assemble the zero-padded [bt, 80, 128] node tensor in VMEM.
        # Pad rows are re-zeroed every step (no reliance on scratch persistence,
        # safe under megacore grid splitting).
        xs_ref[:, 0:N_CLINICAL, :] = c_ref[...]
        xs_ref[:, N_CLINICAL:NC_PAD, :] = jnp.zeros(
            (bt, NC_PAD - N_CLINICAL, FV_DIM), jnp.float32)
        xs_ref[:, NC_PAD:NC_PAD + N_PIXEL, :] = i_ref[...]
        xs_ref[:, NC_PAD + N_PIXEL:N_PAD, :] = jnp.zeros(
            (bt, NI_PAD - N_PIXEL, FV_DIM), jnp.float32)

        # ---- ONE big MXU matmul for the whole batch tile.
        # (bt, 80, 128) -> (bt*80, 128) is a free relayout (80 % 8 == 0);
        # cast to bf16 right before the dot, accumulate in f32.
        x2 = xs_ref[...].reshape(bt * N_PAD, FV_DIM).astype(jnp.bfloat16)
        y = jnp.dot(x2, w_ref[...], preferred_element_type=jnp.float32)
        y = y.reshape(bt, N_PAD, FV_DIM)

        yc = y[:, :NC_PAD, :]                          # (bt, 40, 128), pad rows exactly 0
        yi = y[:, NC_PAD:, :]                          # (bt, 40, 128), pad rows exactly 0

        # mean aggregation over the bipartite + self-loop graph (no A matmul);
        # zero pad rows do not perturb the sums.
        s_cli = jnp.sum(yc, axis=1, keepdims=True)     # (bt, 1, 128)
        s_img = jnp.sum(yi, axis=1, keepdims=True)     # (bt, 1, 128)

        bg = bg_ref[...].reshape(1, 1, FV_DIM)
        hc = jnp.maximum((yc + s_img) * inv_dc + bg, 0.0)   # (bt, 40, 128)
        hi = jnp.maximum((yi + s_cli) * inv_di + bg, 0.0)   # (bt, 40, 128)

        # fused output head; GAP (AvgPool2d) folded into the image-row weights.
        # Padded rows have nonzero relu activations but zero head weight.
        wo_c = wo_ref[0:NC_PAD, :]                     # (40, 128) aligned view
        wo_i = wo_ref[NC_PAD:N_PAD, :]                 # (40, 128) aligned view
        o_ref[...] = jnp.sum(hc * wo_c + hi * wo_i, axis=1)   # (bt, 128) lane-dense

    return kernel


def choose_tiling(batch):
    """Large batch tiles (amortize ~0.35us/step); keep >=2 steps when batch is
    big enough (v7x megacore); keep the output block sublane-aligned."""
    if batch >= 256:
        bt = 128
    elif batch >= 128:
        bt = 64
    elif batch >= 16:
        bt = ((batch + 1) // 2 + 7) // 8 * 8
    else:
        bt = batch          # single grid step; block == full dims, no alignment need
    padded = -(-batch // bt) * bt
    return bt, padded


def network_forward(clinical_embeddings, image_embeddings, params):
    # f32 activations straight into the kernel (cast to bf16 happens in-kernel).
    clinical = clinical_embeddings.astype(jnp.float32)     # [B, 38, 128]
    image = image_embeddings.astype(jnp.float32)           # [B, 36, 128]
    batch = clinical.shape[0]
    bt, padded = choose_tiling(batch)
    if padded != batch:
        clinical = jnp.pad(clinical, ((0, padded - batch), (0, 0), (0, 0)))
        image = jnp.pad(image, ((0, padded - batch), (0, 0), (0, 0)))

    # Output-head weights packed node-major into 80 sublane-aligned rows:
    #   rows  0..37 -> clinical-node head weights
    #   rows 38..39 -> 0 (padding)
    #   rows 40..75 -> gap-row weights / 36 (AvgPool2d folded into the head)
    #   rows 76..79 -> 0 (padding)
    wo = params["w_out_nodes"].astype(jnp.float32)          # (39, 128)
    wo_packed = jnp.concatenate([
        wo[:N_CLINICAL],
        jnp.zeros((NC_PAD - N_CLINICAL, FV_DIM), jnp.float32),
        jnp.broadcast_to(wo[N_CLINICAL:N_CLINICAL + 1] / N_PIXEL,
                         (N_PIXEL, FV_DIM)),
        jnp.zeros((NI_PAD - N_PIXEL, FV_DIM), jnp.float32),
    ], axis=0)                                              # (80, 128)

    out = pl.pallas_call(
        make_fused_kernel(bt),
        out_shape=jax.ShapeDtypeStruct((padded, FV_DIM), jnp.float32),
        grid_spec=pltpu.PrefetchScalarGridSpec(
            num_scalar_prefetch=0,
            grid=(padded // bt,),
            in_specs=[
                pl.BlockSpec((bt, N_CLINICAL, FV_DIM), lambda i: (i, 0, 0)),
                pl.BlockSpec((bt, N_PIXEL, FV_DIM), lambda i: (i, 0, 0)),
                pl.BlockSpec((FV_DIM, FV_DIM), lambda i: (0, 0)),    # W   (bf16, resident)
                pl.BlockSpec((1, FV_DIM), lambda i: (0, 0)),         # b_gcn   (resident)
                pl.BlockSpec((N_PAD, FV_DIM), lambda i: (0, 0)),     # packed W_out (resident)
            ],
            out_specs=pl.BlockSpec((bt, FV_DIM), lambda i: (i, 0)),
            scratch_shapes=[pltpu.VMEM((bt, N_PAD, FV_DIM), jnp.float32)],
        ),
        compiler_params=pltpu.CompilerParams(dimension_semantics=("parallel",)),
    )(clinical, image, params["w_gcn"], params["b_gcn"], wo_packed)

    # Final 128-lane reduction + output bias: trivial trailing XLA op on the
    # lane-dense (batch, 128) partials.
    logits = jnp.sum(out[:batch], axis=-1, keepdims=True) + params["b_out"][None, :]
    return logits


# ---- pure-JAX reference (dense adjacency path), for runtime validation -------
def network_forward_ref(clinical_embeddings, image_embeddings, params, a_norm):
    c = clinical_embeddings.astype(jnp.bfloat16).astype(jnp.float32)
    im = image_embeddings.astype(jnp.bfloat16).astype(jnp.float32)
    w = params["w_gcn"].astype(jnp.float32)
    x = jnp.concatenate([c, im], axis=1)                        # [B, 74, 128]
    agg = jnp.einsum("nm,bmd->bnd", a_norm, x)                  # A_norm @ X
    h = jnp.maximum(jnp.einsum("bnd,df->bnf", agg, w) + params["b_gcn"], 0.0)
    gap = jnp.mean(h[:, N_CLINICAL:, :], axis=1, keepdims=True)  # [B, 1, 128]
    combined = jnp.concatenate([h[:, :N_CLINICAL, :], gap], axis=1)
    combined = combined.reshape(c.shape[0], -1)                 # [B, 4992]
    w_full = params["w_out_nodes"].reshape(-1, N_OUT)           # row-major match
    return combined @ w_full + params["b_out"][None, :]


# ---- deterministic parameter init ---------------------------------------------
def init_params():
    key = jax.random.PRNGKey(0)
    k1, k2, k3, k4 = jax.random.split(key, 4)
    w_gcn = jax.random.normal(k1, (FV_DIM, FV_DIM), jnp.float32) * 0.02
    w_out_full = jax.random.normal(
        k2, (FV_DIM * (N_CLINICAL + 1), N_OUT), jnp.float32) * 0.02
    return {
        "w_gcn": w_gcn.astype(jnp.bfloat16),
        "b_gcn": jax.random.normal(k3, (1, FV_DIM), jnp.float32) * 0.05,
        # Linear(4992 -> 1) weight stored node-major / feature-minor so that
        # w_out_nodes[n, d] == w_out_full[n * 128 + d, 0] (matches the
        # combined.reshape(B, -1) flatten order of the torch module).
        "w_out_nodes": w_out_full[:, 0].reshape(N_CLINICAL + 1, FV_DIM),
        "b_out": jax.random.normal(k4, (N_OUT,), jnp.float32) * 0.05,
    }


if __name__ == "__main__":
    params = init_params()
    edges = get_edges(N_CLINICAL, N_NODES)
    a_norm = jnp.asarray(build_normalized_adjacency(edges, N_NODES))

    fwd = jax.jit(network_forward)

    key = jax.random.PRNGKey(0)
    # batch=2: single-step path (block == full dims); batch=50: multi-step path
    # with batch padding (bt=32, padded to 64, grid=2).
    for batch_size in (2, 50):
        kc, ki, key = jax.random.split(key, 3)
        clinical_embeddings = jax.random.normal(
            kc, (batch_size, N_CLINICAL, FV_DIM), jnp.float32)
        image_embeddings = jax.random.normal(
            ki, (batch_size, N_PIXEL, FV_DIM), jnp.float32)

        out = fwd(clinical_embeddings, image_embeddings, params)
        out = jax.block_until_ready(out)
        assert out.shape == (batch_size, N_OUT)

        ref = network_forward_ref(clinical_embeddings, image_embeddings,
                                  params, a_norm)
        np.testing.assert_allclose(np.asarray(out), np.asarray(ref),
                                   rtol=1e-2, atol=5e-3)

    print("KERNEL_OK")
</pallas_src>

<mosaic_0001>
module attributes {stable_mosaic.version = 11 : i64} {
  func.func @kernel(%arg0: i32, %arg1: memref<2x38x128xf32, #tpu.memory_space<vmem>>, %arg2: memref<2x36x128xf32, #tpu.memory_space<vmem>>, %arg3: memref<128x128xbf16, #tpu.memory_space<vmem>>, %arg4: memref<1x128xf32, #tpu.memory_space<vmem>>, %arg5: memref<80x128xf32, #tpu.memory_space<vmem>>, %arg6: memref<2x128xf32, #tpu.memory_space<vmem>>, %arg7: memref<2x80x128xf32, #tpu.memory_space<vmem>>) attributes {dimension_semantics = [#tpu.dimension_semantics<parallel>], iteration_bounds = array<i64: 1>, scalar_prefetch = 0 : i64, scratch_operands = 1 : i64, tpu.core_type = #tpu.core_type<tc>, window_params = [{transform_indices = @transform_0, window_bounds = array<i64: 2, 38, 128>}, {transform_indices = @transform_1, window_bounds = array<i64: 2, 36, 128>}, {pipeline_mode = #tpu.pipeline_mode<synchronous>, transform_indices = @transform_2, window_bounds = array<i64: 128, 128>}, {pipeline_mode = #tpu.pipeline_mode<synchronous>, transform_indices = @transform_3, window_bounds = array<i64: 1, 128>}, {pipeline_mode = #tpu.pipeline_mode<synchronous>, transform_indices = @transform_4, window_bounds = array<i64: 80, 128>}, {transform_indices = @transform_5, window_bounds = array<i64: 2, 128>}]} {
    %c0 = arith.constant 0 : index
    %c0_0 = arith.constant 0 : index
    %c0_1 = arith.constant 0 : index
    %0 = vector.load %arg1[%c0, %c0_0, %c0_1] : memref<2x38x128xf32, #tpu.memory_space<vmem>>, vector<2x38x128xf32>
    %c0_2 = arith.constant 0 : index
    %c0_3 = arith.constant 0 : index
    %c0_4 = arith.constant 0 : index
    %1 = vector.load %arg7[%c0_2, %c0_3, %c0_4] : memref<2x80x128xf32, #tpu.memory_space<vmem>>, vector<2x38x128xf32>
    tpu.vector_store %arg7[%c0_2, %c0_3, %c0_4], %0 {strides = array<i32>} : memref<2x80x128xf32, #tpu.memory_space<vmem>>, vector<2x38x128xf32>,
    %cst = arith.constant 0.000000e+00 : f32
    %2 = vector.broadcast %cst : f32 to vector<2x2x128xf32>
    %c0_5 = arith.constant 0 : index
    %c38 = arith.constant 38 : index
    %c0_6 = arith.constant 0 : index
    %3 = vector.load %arg7[%c0_5, %c38, %c0_6] : memref<2x80x128xf32, #tpu.memory_space<vmem>>, vector<2x2x128xf32>
    tpu.vector_store %arg7[%c0_5, %c38, %c0_6], %2 {strides = array<i32>} : memref<2x80x128xf32, #tpu.memory_space<vmem>>, vector<2x2x128xf32>,
    %c0_7 = arith.constant 0 : index
    %c0_8 = arith.constant 0 : index
    %c0_9 = arith.constant 0 : index
    %4 = vector.load %arg2[%c0_7, %c0_8, %c0_9] : memref<2x36x128xf32, #tpu.memory_space<vmem>>, vector<2x36x128xf32>
    %c0_10 = arith.constant 0 : index
    %c40 = arith.constant 40 : index
    %c0_11 = arith.constant 0 : index
    %5 = vector.load %arg7[%c0_10, %c40, %c0_11] : memref<2x80x128xf32, #tpu.memory_space<vmem>>, vector<2x36x128xf32>
    tpu.vector_store %arg7[%c0_10, %c40, %c0_11], %4 {strides = array<i32>} : memref<2x80x128xf32, #tpu.memory_space<vmem>>, vector<2x36x128xf32>,
    %cst_12 = arith.constant 0.000000e+00 : f32
    %6 = vector.broadcast %cst_12 : f32 to vector<2x4x128xf32>
    %c0_13 = arith.constant 0 : index
    %c76 = arith.constant 76 : index
    %c0_14 = arith.constant 0 : index
    %7 = vector.load %arg7[%c0_13, %c76, %c0_14] : memref<2x80x128xf32, #tpu.memory_space<vmem>>, vector<2x4x128xf32>
    tpu.vector_store %arg7[%c0_13, %c76, %c0_14], %6 {strides = array<i32>} : memref<2x80x128xf32, #tpu.memory_space<vmem>>, vector<2x4x128xf32>,
    %c0_15 = arith.constant 0 : index
    %c0_16 = arith.constant 0 : index
    %c0_17 = arith.constant 0 : index
    %8 = vector.load %arg7[%c0_15, %c0_16, %c0_17] : memref<2x80x128xf32, #tpu.memory_space<vmem>>, vector<2x80x128xf32>
    %9 = vector.shape_cast %8 : vector<2x80x128xf32> to vector<160x128xf32>
    %10 = arith.truncf %9 : vector<160x128xf32> to vector<160x128xbf16>
    %c0_18 = arith.constant 0 : index
    %c0_19 = arith.constant 0 : index
    %11 = vector.load %arg3[%c0_18, %c0_19] : memref<128x128xbf16, #tpu.memory_space<vmem>>, vector<128x128xbf16>
    %cst_20 = arith.constant dense<0.000000e+00> : vector<160x128xf32>
    %12 = tpu.matmul %10, %11, %cst_20 {dimension_numbers = #tpu.dot_dimension_numbers<[1], [0], [0], [1], [0, 0, 1, 1], [], []>} : vector<160x128xbf16>, vector<128x128xbf16>, vector<160x128xf32> -> vector<160x128xf32>
    %13 = vector.shape_cast %12 : vector<160x128xf32> to vector<2x80x128xf32>
    %14 = vector.extract_strided_slice %13 {offsets = [0, 0, 0], sizes = [2, 40, 128], strides = [1, 1, 1]} : vector<2x80x128xf32> to vector<2x40x128xf32>
    %15 = vector.extract_strided_slice %13 {offsets = [0, 40, 0], sizes = [2, 40, 128], strides = [1, 1, 1]} : vector<2x80x128xf32> to vector<2x40x128xf32>
    %cst_21 = arith.constant dense<0.000000e+00> : vector<2x128xf32>
    %16 = vector.multi_reduction <add>, %14, %cst_21 [1] : vector<2x40x128xf32> to vector<2x128xf32>
    %17 = vector.shape_cast %16 : vector<2x128xf32> to vector<2x1x128xf32>
    %cst_22 = arith.constant dense<0.000000e+00> : vector<2x128xf32>
    %18 = vector.multi_reduction <add>, %15, %cst_22 [1] : vector<2x40x128xf32> to vector<2x128xf32>
    %19 = vector.shape_cast %18 : vector<2x128xf32> to vector<2x1x128xf32>
    %c0_23 = arith.constant 0 : index
    %c0_24 = arith.constant 0 : index
    %20 = vector.load %arg4[%c0_23, %c0_24] : memref<1x128xf32, #tpu.memory_space<vmem>>, vector<1x128xf32>
    %21 = vector.shape_cast %20 : vector<1x128xf32> to vector<1x1x128xf32>
    %22 = vector.broadcast %19 : vector<2x1x128xf32> to vector<2x40x128xf32>
    %23 = arith.addf %14, %22 : vector<2x40x128xf32>
    %cst_25 = arith.constant 0.0270270277 : f32
    %24 = vector.broadcast %cst_25 : f32 to vector<2x40x128xf32>
    %25 = arith.mulf %23, %24 : vector<2x40x128xf32>
    %26 = vector.broadcast %21 : vector<1x1x128xf32> to vector<2x40x128xf32>
    %27 = arith.addf %25, %26 : vector<2x40x128xf32>
    %cst_26 = arith.constant 0.000000e+00 : f32
    %28 = vector.broadcast %cst_26 : f32 to vector<2x40x128xf32>
    %29 = arith.maximumf %27, %28 : vector<2x40x128xf32>
    %30 = vector.broadcast %17 : vector<2x1x128xf32> to vector<2x40x128xf32>
    %31 = arith.addf %15, %30 : vector<2x40x128xf32>
    %cst_27 = arith.constant 0.025641026 : f32
    %32 = vector.broadcast %cst_27 : f32 to vector<2x40x128xf32>
    %33 = arith.mulf %31, %32 : vector<2x40x128xf32>
    %34 = vector.broadcast %21 : vector<1x1x128xf32> to vector<2x40x128xf32>
    %35 = arith.addf %33, %34 : vector<2x40x128xf32>
    %cst_28 = arith.constant 0.000000e+00 : f32
    %36 = vector.broadcast %cst_28 : f32 to vector<2x40x128xf32>
    %37 = arith.maximumf %35, %36 : vector<2x40x128xf32>
    %c0_29 = arith.constant 0 : index
    %c0_30 = arith.constant 0 : index
    %38 = vector.load %arg5[%c0_29, %c0_30] : memref<80x128xf32, #tpu.memory_space<vmem>>, vector<40x128xf32>
    %c40_31 = arith.constant 40 : index
    %c0_32 = arith.constant 0 : index
    %39 = vector.load %arg5[%c40_31, %c0_32] : memref<80x128xf32, #tpu.memory_space<vmem>>, vector<40x128xf32>
    %40 = vector.shape_cast %38 : vector<40x128xf32> to vector<1x40x128xf32>
    %41 = vector.broadcast %40 : vector<1x40x128xf32> to vector<2x40x128xf32>
    %42 = arith.mulf %29, %41 : vector<2x40x128xf32>
    %43 = vector.shape_cast %39 : vector<40x128xf32> to vector<1x40x128xf32>
    %44 = vector.broadcast %43 : vector<1x40x128xf32> to vector<2x40x128xf32>
    %45 = arith.mulf %37, %44 : vector<2x40x128xf32>
    %46 = arith.addf %42, %45 : vector<2x40x128xf32>
    %cst_33 = arith.constant dense<0.000000e+00> : vector<2x128xf32>
    %47 = vector.multi_reduction <add>, %46, %cst_33 [1] : vector<2x40x128xf32> to vector<2x128xf32>
    %c0_34 = arith.constant 0 : index
    %c0_35 = arith.constant 0 : index
    %48 = vector.load %arg6[%c0_34, %c0_35] : memref<2x128xf32, #tpu.memory_space<vmem>>, vector<2x128xf32>
    tpu.vector_store %arg6[%c0_34, %c0_35], %47 {strides = array<i32>} : memref<2x128xf32, #tpu.memory_space<vmem>>, vector<2x128xf32>,
    return
  }
  func.func @transform_0(%arg0: i32) -> (i32, i32, i32) {
    %c0_i32 = arith.constant 0 : i32
    %c0_i32_0 = arith.constant 0 : i32
    %c0_i32_1 = arith.constant 0 : i32
    return %arg0, %c0_i32, %c0_i32_0 : i32, i32, i32
  }
  func.func @transform_1(%arg0: i32) -> (i32, i32, i32) {
    %c0_i32 = arith.constant 0 : i32
    %c0_i32_0 = arith.constant 0 : i32
    %c0_i32_1 = arith.constant 0 : i32
    return %arg0, %c0_i32, %c0_i32_0 : i32, i32, i32
  }
  func.func @transform_2(%arg0: i32) -> (i32, i32) {
    %c0_i32 = arith.constant 0 : i32
    %c0_i32_0 = arith.constant 0 : i32
    %c0_i32_1 = arith.constant 0 : i32
    return %c0_i32, %c0_i32_0 : i32, i32
  }
  func.func @transform_3(%arg0: i32) -> (i32, i32) {
    %c0_i32 = arith.constant 0 : i32
    %c0_i32_0 = arith.constant 0 : i32
    %c0_i32_1 = arith.constant 0 : i32
    return %c0_i32, %c0_i32_0 : i32, i32
  }
  func.func @transform_4(%arg0: i32) -> (i32, i32) {
    %c0_i32 = arith.constant 0 : i32
    %c0_i32_0 = arith.constant 0 : i32
    %c0_i32_1 = arith.constant 0 : i32
    return %c0_i32, %c0_i32_0 : i32, i32
  }
  func.func @transform_5(%arg0: i32) -> (i32, i32) {
    %c0_i32 = arith.constant 0 : i32
    %c0_i32_0 = arith.constant 0 : i32
    return %arg0, %c0_i32 : i32, i32
  }
}

</mosaic_0001>

<llo_original>
// kernel: network_forward.1
$region0: #{network_forward.1}
  #allocation0 [shape = 'u32[]', space=smem, size = 0x4, offset = 0x4, fixed_abs, tag = 'smem constant byte address 0x4 - core index']
  #allocation1 [shape = 'u32[144,128]{1,0:T(1,128)}', space=vmem, size = 0x12000, scoped, tag = 'internal scratch']
  #allocation2 [shape = 'f32[2,80,128]{2,1,0:T(8,128)}', space=vmem, size = 0x14000, scoped, tag = 'scratch operand']
  %s0 = inlined_call_operand.vmem [shape: f32[2,38,128], index: 0, kind: input, shape index: {}]
  %s1 = inlined_call_operand.vmem [shape: f32[2,36,128], index: 1, kind: input, shape index: {}]
  %s2 = inlined_call_operand.vmem [shape: bf16[128,128], index: 2, kind: input, shape index: {}]
  %s3 = inlined_call_operand.vmem [shape: f32[1,128], index: 3, kind: input, shape index: {}]
  %s4 = inlined_call_operand.vmem [shape: f32[80,128], index: 4, kind: input, shape index: {}]
  %s5 = inlined_call_operand.vmem [shape: f32[2,128], index: 5, kind: output, shape index: {}]
  %s6 = sld [smem:[#allocation0]]
  $region30: #{network_forward.1} parent=0
    _
  %s8 = ssub.s32 1, %s6
  %s9 = scalar_select 0, %s8, %s6
  // Predicated region
  $region2: #{network_forward.1} parent=0 // pred_check
    _
  $region3: #{network_forward.1} parent=0 // pred_check_branch
    %11 = sbr.rel (0) target = $region5
  $region4: #{network_forward.1} parent=0 // pred_region
    _
  $region5: #{network_forward.1} parent=0 // pred_fallthru
    _
  // Predicated region
  $region6: #{network_forward.1} parent=0 // pred_check
    _
  $region7: #{network_forward.1} parent=0 // pred_check_branch
    %13 = sbr.rel (0) target = $region9
  $region8: #{network_forward.1} parent=0 // pred_region
    _
  $region9: #{network_forward.1} parent=0 // pred_fallthru
    _
  // Predicated region
  $region10: #{network_forward.1} parent=0 // pred_check
    _
  $region11: #{network_forward.1} parent=0 // pred_check_branch
    %15 = sbr.rel (0) target = $region13
  $region12: #{network_forward.1} parent=0 // pred_region
    _
  $region13: #{network_forward.1} parent=0 // pred_fallthru
    _
  // Predicated region
  $region14: #{network_forward.1} parent=0 // pred_check
    _
  $region15: #{network_forward.1} parent=0 // pred_check_branch
    %17 = sbr.rel (0) target = $region17
  $region16: #{network_forward.1} parent=0 // pred_region
    _
  $region17: #{network_forward.1} parent=0 // pred_fallthru
    _
  // Predicated region
  $region18: #{network_forward.1} parent=0 // pred_check
    _
  $region19: #{network_forward.1} parent=0 // pred_check_branch
    %19 = sbr.rel (0) target = $region21
  $region20: #{network_forward.1} parent=0 // pred_region
    _
  $region21: #{network_forward.1} parent=0 // pred_fallthru
    _
  %v21 = vld [vmem:[%s0] sm:$0xff]
  %v22 = vld [vmem:[%s0 + $0x8] sm:$0xff]
  %v23 = vld [vmem:[%s0 + $0x10] sm:$0xff]
  %v24 = vld [vmem:[%s0 + $0x18] sm:$0xff]
  %v25 = vld [vmem:[%s0 + $0x20] sm:$0x3f]
  %v26 = vld [vmem:[%s0 + $0x28] sm:$0xff]
  %v27 = vld [vmem:[%s0 + $0x30] sm:$0xff]
  %v28 = vld [vmem:[%s0 + $0x38] sm:$0xff]
  %v29 = vld [vmem:[%s0 + $0x40] sm:$0xff]
  %v30 = vld [vmem:[%s0 + $0x48] sm:$0x3f]
  %31 = vst [vmem:[#allocation2] sm:$0xff] %v21
  %32 = vst [vmem:[#allocation2 + $0x8] sm:$0xff] %v22
  %33 = vst [vmem:[#allocation2 + $0x10] sm:$0xff] %v23
  %34 = vst [vmem:[#allocation2 + $0x18] sm:$0xff] %v24
  %35 = vst [vmem:[#allocation2 + $0x20] sm:$0x3f] %v25
  %36 = vst [vmem:[#allocation2 + $0x50] sm:$0xff] %v26
  %37 = vst [vmem:[#allocation2 + $0x58] sm:$0xff] %v27
  %38 = vst [vmem:[#allocation2 + $0x60] sm:$0xff] %v28
  %39 = vst [vmem:[#allocation2 + $0x68] sm:$0xff] %v29
  %40 = vst [vmem:[#allocation2 + $0x70] sm:$0x3f] %v30
  %41 = vst [vmem:[#allocation2 + $0x26] sm:$0x3] 0.0
  %42 = vst [vmem:[#allocation2 + $0x76] sm:$0x3] 0.0
  %v43 = vld [vmem:[%s1] sm:$0xff]
  %v44 = vld [vmem:[%s1 + $0x8] sm:$0xff]
  %v45 = vld [vmem:[%s1 + $0x10] sm:$0xff]
  %v46 = vld [vmem:[%s1 + $0x18] sm:$0xff]
  %v47 = vld [vmem:[%s1 + $0x20] sm:$0xf]
  %v48 = vld [vmem:[%s1 + $0x28] sm:$0xff]
  %v49 = vld [vmem:[%s1 + $0x30] sm:$0xff]
  %v50 = vld [vmem:[%s1 + $0x38] sm:$0xff]
  %v51 = vld [vmem:[%s1 + $0x40] sm:$0xff]
  %v52 = vld [vmem:[%s1 + $0x48] sm:$0xf]
  %53 = vst [vmem:[#allocation2 + $0x28] sm:$0xff] %v43
  %54 = vst [vmem:[#allocation2 + $0x30] sm:$0xff] %v44
  %55 = vst [vmem:[#allocation2 + $0x38] sm:$0xff] %v45
  %56 = vst [vmem:[#allocation2 + $0x40] sm:$0xff] %v46
  %57 = vst [vmem:[#allocation2 + $0x48] sm:$0xf] %v47
  %58 = vst [vmem:[#allocation2 + $0x78] sm:$0xff] %v48
  %59 = vst [vmem:[#allocation2 + $0x80] sm:$0xff] %v49
  %60 = vst [vmem:[#allocation2 + $0x88] sm:$0xff] %v50
  %61 = vst [vmem:[#allocation2 + $0x90] sm:$0xff] %v51
  %62 = vst [vmem:[#allocation2 + $0x98] sm:$0xf] %v52
  %63 = vst [vmem:[#allocation2 + $0x4c] sm:$0xf] 0.0
  %64 = vst [vmem:[#allocation2 + $0x9c] sm:$0xf] 0.0
  %v65 = vld [vmem:[#allocation2] sm:$0xff]
  %v66 = vld [vmem:[#allocation2 + $0x8] sm:$0xff]
  %v67 = vld [vmem:[#allocation2 + $0x10] sm:$0xff]
  %v68 = vld [vmem:[#allocation2 + $0x18] sm:$0xff]
  %v69 = vld [vmem:[#allocation2 + $0x20] sm:$0xff]
  %v70 = vld [vmem:[#allocation2 + $0x28] sm:$0xff]
  %v71 = vld [vmem:[#allocation2 + $0x30] sm:$0xff]
  %v72 = vld [vmem:[#allocation2 + $0x38] sm:$0xff]
  %v73 = vld [vmem:[#allocation2 + $0x40] sm:$0xff]
  %v74 = vld [vmem:[#allocation2 + $0x48] sm:$0xff]
  %v75 = vld [vmem:[#allocation2 + $0x50] sm:$0xff]
  %v76 = vld [vmem:[#allocation2 + $0x58] sm:$0xff]
  %v77 = vld [vmem:[#allocation2 + $0x60] sm:$0xff]
  %v78 = vld [vmem:[#allocation2 + $0x68] sm:$0xff]
  %v79 = vld [vmem:[#allocation2 + $0x70] sm:$0xff]
  %v80 = vld [vmem:[#allocation2 + $0x78] sm:$0xff]
  %v81 = vld [vmem:[#allocation2 + $0x80] sm:$0xff]
  %v82 = vld [vmem:[#allocation2 + $0x88] sm:$0xff]
  %v83 = vld [vmem:[#allocation2 + $0x90] sm:$0xff]
  %v84 = vld [vmem:[#allocation2 + $0x98] sm:$0xff]
  %v85 = vpack.c.bf16 %v66, %v65
  %v86 = vpack.c.bf16 %v68, %v67
  %v87 = vpack.c.bf16 %v70, %v69
  %v88 = vpack.c.bf16 %v72, %v71
  %v89 = vpack.c.bf16 %v74, %v73
  %v90 = vpack.c.bf16 %v76, %v75
  %v91 = vpack.c.bf16 %v78, %v77
  %v92 = vpack.c.bf16 %v80, %v79
  %v93 = vpack.c.bf16 %v82, %v81
  %v94 = vpack.c.bf16 %v84, %v83
  %v95 = vld [vmem:[%s2] sm:$0xf]
  %v96 = vld [vmem:[%s2 + $0x4] sm:$0xf]
  %v97 = vld [vmem:[%s2 + $0x8] sm:$0xf]
  %v98 = vld [vmem:[%s2 + $0xc] sm:$0xf]
  %v99 = vld [vmem:[%s2 + $0x10] sm:$0xf]
  %v100 = vld [vmem:[%s2 + $0x14] sm:$0xf]
  %v101 = vld [vmem:[%s2 + $0x18] sm:$0xf]
  %v102 = vld [vmem:[%s2 + $0x1c] sm:$0xf]
  %v103 = vld [vmem:[%s2 + $0x20] sm:$0xf]
  %v104 = vld [vmem:[%s2 + $0x24] sm:$0xf]
  %v105 = vld [vmem:[%s2 + $0x28] sm:$0xf]
  %v106 = vld [vmem:[%s2 + $0x2c] sm:$0xf]
  %v107 = vld [vmem:[%s2 + $0x30] sm:$0xf]
  %v108 = vld [vmem:[%s2 + $0x34] sm:$0xf]
  %v109 = vld [vmem:[%s2 + $0x38] sm:$0xf]
  %v110 = vld [vmem:[%s2 + $0x3c] sm:$0xf]
  %v127 = vunpack.c.l.b16 %v95
  %v128 = vunpack.c.l.b16 %v96
  %v129 = vunpack.c.l.b16 %v97
  %v130 = vunpack.c.l.b16 %v98
  %v131 = vunpack.c.l.b16 %v99
  %v132 = vunpack.c.l.b16 %v100
  %v133 = vunpack.c.l.b16 %v101
  %v134 = vunpack.c.l.b16 %v102
  %v135 = vunpack.c.l.b16 %v103
  %v136 = vunpack.c.l.b16 %v104
  %v137 = vunpack.c.l.b16 %v105
  %v138 = vunpack.c.l.b16 %v106
  %v139 = vunpack.c.l.b16 %v107
  %v140 = vunpack.c.l.b16 %v108
  %v141 = vunpack.c.l.b16 %v109
  %v142 = vunpack.c.l.b16 %v110
  %v143 = vpack.c.b16 %v128, %v127
  %v144 = vpack.c.b16 %v130, %v129
  %v145 = vpack.c.b16 %v132, %v131
  %v146 = vpack.c.b16 %v134, %v133
  %v147 = vpack.c.b16 %v136, %v135
  %v148 = vpack.c.b16 %v138, %v137
  %v149 = vpack.c.b16 %v140, %v139
  %v150 = vpack.c.b16 %v142, %v141
  %159 = vmatprep.subr.bf16.mxu0 0
  %160 = vmatpush1.bf16.msra.mxu0 %v150
  %161 = vmatprep.subr.bf16.mxu0 0
  %162 = vmatpush1.bf16.msra.mxu0 %v149
  %163 = vmatprep.subr.bf16.mxu0 0
  %164 = vmatpush1.bf16.msra.mxu0 %v148
  %165 = vmatprep.subr.bf16.mxu0 0
  %166 = vmatpush1.bf16.msra.mxu0 %v147
  %167 = vmatprep.subr.bf16.mxu0 0
  %168 = vmatpush1.bf16.msra.mxu0 %v146
  %169 = vmatprep.subr.bf16.mxu0 0
  %170 = vmatpush1.bf16.msra.mxu0 %v145
  %171 = vmatprep.subr.bf16.mxu0 0
  %172 = vmatpush1.bf16.msra.mxu0 %v144
  %173 = vmatprep.subr.bf16.mxu0 0
  %174 = vmatpush1.bf16.msra.mxu0 %v143
  %175 = vmatprep.subr.bf16.mxu0 0
  %176 = vmatpush2.bf16.msra.mxu0 0
  %177 = vmatprep.subr.bf16.mxu0 0
  %178 = vmatpush2.bf16.msra.mxu0 0
  %179 = vmatprep.subr.bf16.mxu0 0
  %180 = vmatpush2.bf16.msra.mxu0 0
  %181 = vmatprep.subr.bf16.mxu0 0
  %182 = vmatpush2.bf16.msra.mxu0 0
  %183 = vmatprep.subr.bf16.mxu0 0
  %184 = vmatpush2.bf16.msra.mxu0 0
  %185 = vmatprep.subr.bf16.mxu0 0
  %186 = vmatpush2.bf16.msra.mxu0 0
  %187 = vmatprep.subr.bf16.mxu0 0
  %188 = vmatpush2.bf16.msra.mxu0 0
  %189 = vmatprep.subr.bf16.mxu0 0
  %190 = vmatpush2.bf16.msra.mxu0 0
  %191 = vmatprep.mubr.bf16.mxu0 0
  %192 = vmatmul.mubr.bf16.gmra.mxu0 %v85
  %v193 = vpop.f32.mrf.mxu0
  %v194 = vadd.f32 0.0, %v193
  %v195 = vpop.f32.mrf.mxu0
  %v196 = vpop.f32.mrf.mxu0
  %v197 = vadd.f32 0.0, %v196
  %v198 = vpop.f32.mrf.mxu0
  %199 = vmatprep.mubr.bf16.mxu0 0
  %200 = vmatmul.mubr.bf16.gmra.mxu0 %v86
  %v201 = vpop.f32.mrf.mxu0
  %v202 = vadd.f32 0.0, %v201
  %v203 = vpop.f32.mrf.mxu0
  %v204 = vpop.f32.mrf.mxu0
  %v205 = vadd.f32 0.0, %v204
  %v206 = vpop.f32.mrf.mxu0
  %207 = vmatprep.mubr.bf16.mxu0 0
  %208 = vmatmul.mubr.bf16.gmra.mxu0 %v87
  %v209 = vpop.f32.mrf.mxu0
  %v210 = vadd.f32 0.0, %v209
  %v211 = vpop.f32.mrf.mxu0
  %v212 = vpop.f32.mrf.mxu0
  %v213 = vadd.f32 0.0, %v212
  %v214 = vpop.f32.mrf.mxu0
  %215 = vmatprep.mubr.bf16.mxu0 0
  %216 = vmatmul.mubr.bf16.gmra.mxu0 %v88
  %v217 = vpop.f32.mrf.mxu0
  %v218 = vadd.f32 0.0, %v217
  %v219 = vpop.f32.mrf.mxu0
  %v220 = vpop.f32.mrf.mxu0
  %v221 = vadd.f32 0.0, %v220
  %v222 = vpop.f32.mrf.mxu0
  %223 = vmatprep.mubr.bf16.mxu0 0
  %224 = vmatmul.mubr.bf16.gmra.mxu0 %v89
  %v225 = vpop.f32.mrf.mxu0
  %v226 = vadd.f32 0.0, %v225
  %v227 = vpop.f32.mrf.mxu0
  %v228 = vpop.f32.mrf.mxu0
  %v229 = vadd.f32 0.0, %v228
  %v230 = vpop.f32.mrf.mxu0
  %231 = vmatprep.mubr.bf16.mxu0 0
  %232 = vmatmul.mubr.bf16.gmra.mxu0 %v90
  %v233 = vpop.f32.mrf.mxu0
  %v234 = vadd.f32 0.0, %v233
  %v235 = vpop.f32.mrf.mxu0
  %v236 = vpop.f32.mrf.mxu0
  %v237 = vadd.f32 0.0, %v236
  %v238 = vpop.f32.mrf.mxu0
  %239 = vmatprep.mubr.bf16.mxu0 0
  %240 = vmatmul.mubr.bf16.gmra.mxu0 %v91
  %v241 = vpop.f32.mrf.mxu0
  %v242 = vadd.f32 0.0, %v241
  %v243 = vpop.f32.mrf.mxu0
  %v244 = vpop.f32.mrf.mxu0
  %v245 = vadd.f32 0.0, %v244
  %v246 = vpop.f32.mrf.mxu0
  %247 = vmatprep.mubr.bf16.mxu0 0
  %248 = vmatmul.mubr.bf16.gmra.mxu0 %v92
  %v249 = vpop.f32.mrf.mxu0
  %v250 = vadd.f32 0.0, %v249
  %v251 = vpop.f32.mrf.mxu0
  %v252 = vpop.f32.mrf.mxu0
  %v253 = vadd.f32 0.0, %v252
  %v254 = vpop.f32.mrf.mxu0
  %255 = vmatprep.mubr.bf16.mxu0 0
  %256 = vmatmul.mubr.bf16.gmra.mxu0 %v93
  %v257 = vpop.f32.mrf.mxu0
  %v258 = vadd.f32 0.0, %v257
  %v259 = vpop.f32.mrf.mxu0
  %v260 = vpop.f32.mrf.mxu0
  %v261 = vadd.f32 0.0, %v260
  %v262 = vpop.f32.mrf.mxu0
  %263 = vmatprep.mubr.bf16.mxu0 0
  %264 = vmatmul.mubr.bf16.gmra.mxu0 %v94
  %v265 = vpop.f32.mrf.mxu0
  %v266 = vadd.f32 0.0, %v265
  %v267 = vpop.f32.mrf.mxu0
  %v268 = vpop.f32.mrf.mxu0
  %v269 = vadd.f32 0.0, %v268
  %v270 = vpop.f32.mrf.mxu0
  %271 = vdwg.mxu0
  %v272 = vadd.f32 %v194, %v197
  %v273 = vadd.f32 %v272, %v202
  %v274 = vadd.f32 %v273, %v205
  %v275 = vadd.f32 %v274, %v210
  %v276 = vrot.slane %v275, 4
  %v277 = vadd.f32 %v275, %v276
  %v278 = vrot.slane %v277, 2
  %v279 = vadd.f32 %v277, %v278
  %v280 = vrot.slane %v279, 1
  %v281 = vadd.f32 %v279, %v280
  %v282 = vadd.f32 %v234, %v237
  %v283 = vadd.f32 %v282, %v242
  %v284 = vadd.f32 %v283, %v245
  %v285 = vadd.f32 %v284, %v250
  %v286 = vrot.slane %v285, 4
  %v287 = vadd.f32 %v285, %v286
  %v288 = vrot.slane %v287, 2
  %v289 = vadd.f32 %v287, %v288
  %v290 = vrot.slane %v289, 1
  %v291 = vadd.f32 %v289, %v290
  %v292 = vadd.f32 %v213, %v218
  %v293 = vadd.f32 %v292, %v221
  %v294 = vadd.f32 %v293, %v226
  %v295 = vadd.f32 %v294, %v229
  %v296 = vrot.slane %v295, 4
  %v297 = vadd.f32 %v295, %v296
  %v298 = vrot.slane %v297, 2
  %v299 = vadd.f32 %v297, %v298
  %v300 = vrot.slane %v299, 1
  %v301 = vadd.f32 %v299, %v300
  %v302 = vadd.f32 %v253, %v258
  %v303 = vadd.f32 %v302, %v261
  %v304 = vadd.f32 %v303, %v266
  %v305 = vadd.f32 %v304, %v269
  %v306 = vrot.slane %v305, 4
  %v307 = vadd.f32 %v305, %v306
  %v308 = vrot.slane %v307, 2
  %v309 = vadd.f32 %v307, %v308
  %v310 = vrot.slane %v309, 1
  %v311 = vadd.f32 %v309, %v310
  %v312 = vld [vmem:[%s3] sm:$0x1]
  %v313 = vadd.f32 %v194, %v301
  %v314 = vadd.f32 %v197, %v301
  %v315 = vadd.f32 %v202, %v301
  %v316 = vadd.f32 %v205, %v301
  %v317 = vadd.f32 %v210, %v301
  %v318 = vadd.f32 %v234, %v311
  %v319 = vadd.f32 %v237, %v311
  %v320 = vadd.f32 %v242, %v311
  %v321 = vadd.f32 %v245, %v311
  %v322 = vadd.f32 %v250, %v311
  %v323 = vmul.f32 %v313, 0.027027028
  %v324 = vmul.f32 %v314, 0.027027028
  %v325 = vmul.f32 %v315, 0.027027028
  %v326 = vmul.f32 %v316, 0.027027028
  %v327 = vmul.f32 %v317, 0.027027028
  %v328 = vmul.f32 %v318, 0.027027028
  %v329 = vmul.f32 %v319, 0.027027028
  %v330 = vmul.f32 %v320, 0.027027028
  %v331 = vmul.f32 %v321, 0.027027028
  %v332 = vmul.f32 %v322, 0.027027028
  %v334 = vlaneseq
  %v335 = vshrl.u32 %v334, 7
  %v336 = vsub.s32 0, %v335
  %v337 = vrot.slane %v312, %v336
  %v339 = vadd.f32 %v323, %v337
  %v340 = vadd.f32 %v324, %v337
  %v341 = vadd.f32 %v325, %v337
  %v342 = vadd.f32 %v326, %v337
  %v343 = vadd.f32 %v327, %v337
  %v344 = vadd.f32 %v328, %v337
  %v345 = vadd.f32 %v329, %v337
  %v346 = vadd.f32 %v330, %v337
  %v347 = vadd.f32 %v331, %v337
  %v348 = vadd.f32 %v332, %v337
  %v349 = vmax.f32 %v339, 0.0
  %v350 = vmax.f32 %v340, 0.0
  %v351 = vmax.f32 %v341, 0.0
  %v352 = vmax.f32 %v342, 0.0
  %v353 = vmax.f32 %v343, 0.0
  %v354 = vmax.f32 %v344, 0.0
  %v355 = vmax.f32 %v345, 0.0
  %v356 = vmax.f32 %v346, 0.0
  %v357 = vmax.f32 %v347, 0.0
  %v358 = vmax.f32 %v348, 0.0
  %v359 = vadd.f32 %v213, %v281
  %v360 = vadd.f32 %v218, %v281
  %v361 = vadd.f32 %v221, %v281
  %v362 = vadd.f32 %v226, %v281
  %v363 = vadd.f32 %v229, %v281
  %v364 = vadd.f32 %v253, %v291
  %v365 = vadd.f32 %v258, %v291
  %v366 = vadd.f32 %v261, %v291
  %v367 = vadd.f32 %v266, %v291
  %v368 = vadd.f32 %v269, %v291
  %v369 = vmul.f32 %v359, 0.025641026
  %v370 = vmul.f32 %v360, 0.025641026
  %v371 = vmul.f32 %v361, 0.025641026
  %v372 = vmul.f32 %v362, 0.025641026
  %v373 = vmul.f32 %v363, 0.025641026
  %v374 = vmul.f32 %v364, 0.025641026
  %v375 = vmul.f32 %v365, 0.025641026
  %v376 = vmul.f32 %v366, 0.025641026
  %v377 = vmul.f32 %v367, 0.025641026
  %v378 = vmul.f32 %v368, 0.025641026
  %v379 = vadd.f32 %v369, %v337
  %v380 = vadd.f32 %v370, %v337
  %v381 = vadd.f32 %v371, %v337
  %v382 = vadd.f32 %v372, %v337
  %v383 = vadd.f32 %v373, %v337
  %v384 = vadd.f32 %v374, %v337
  %v385 = vadd.f32 %v375, %v337
  %v386 = vadd.f32 %v376, %v337
  %v387 = vadd.f32 %v377, %v337
  %v388 = vadd.f32 %v378, %v337
  %v389 = vmax.f32 %v379, 0.0
  %v390 = vmax.f32 %v380, 0.0
  %v391 = vmax.f32 %v381, 0.0
  %v392 = vmax.f32 %v382, 0.0
  %v393 = vmax.f32 %v383, 0.0
  %v394 = vmax.f32 %v384, 0.0
  %v395 = vmax.f32 %v385, 0.0
  %v396 = vmax.f32 %v386, 0.0
  %v397 = vmax.f32 %v387, 0.0
  %v398 = vmax.f32 %v388, 0.0
  %v399 = vld [vmem:[%s4] sm:$0xff]
  %v400 = vld [vmem:[%s4 + $0x8] sm:$0xff]
  %v401 = vld [vmem:[%s4 + $0x10] sm:$0xff]
  %v402 = vld [vmem:[%s4 + $0x18] sm:$0xff]
  %v403 = vld [vmem:[%s4 + $0x20] sm:$0xff]
  %v404 = vld [vmem:[%s4 + $0x28] sm:$0xff]
  %v405 = vld [vmem:[%s4 + $0x30] sm:$0xff]
  %v406 = vld [vmem:[%s4 + $0x38] sm:$0xff]
  %v407 = vld [vmem:[%s4 + $0x40] sm:$0xff]
  %v408 = vld [vmem:[%s4 + $0x48] sm:$0xff]
  %v409 = vmul.f32 %v349, %v399
  %v410 = vmul.f32 %v350, %v400
  %v411 = vmul.f32 %v351, %v401
  %v412 = vmul.f32 %v352, %v402
  %v413 = vmul.f32 %v353, %v403
  %v414 = vmul.f32 %v354, %v399
  %v415 = vmul.f32 %v355, %v400
  %v416 = vmul.f32 %v356, %v401
  %v417 = vmul.f32 %v357, %v402
  %v418 = vmul.f32 %v358, %v403
  %v419 = vmul.f32 %v389, %v404
  %v420 = vmul.f32 %v390, %v405
  %v421 = vmul.f32 %v391, %v406
  %v422 = vmul.f32 %v392, %v407
  %v423 = vmul.f32 %v393, %v408
  %v424 = vmul.f32 %v394, %v404
  %v425 = vmul.f32 %v395, %v405
  %v426 = vmul.f32 %v396, %v406
  %v427 = vmul.f32 %v397, %v407
  %v428 = vmul.f32 %v398, %v408
  %v429 = vadd.f32 %v409, %v419
  %v430 = vadd.f32 %v410, %v420
  %v431 = vadd.f32 %v411, %v421
  %v432 = vadd.f32 %v412, %v422
  %v433 = vadd.f32 %v413, %v423
  %v434 = vadd.f32 %v414, %v424
  %v435 = vadd.f32 %v415, %v425
  %v436 = vadd.f32 %v416, %v426
  %v437 = vadd.f32 %v417, %v427
  %v438 = vadd.f32 %v418, %v428
  %v439 = vadd.f32 %v429, %v430
  %v440 = vadd.f32 %v439, %v431
  %v441 = vadd.f32 %v440, %v432
  %v442 = vadd.f32 %v441, %v433
  %v443 = vrot.slane %v442, 4
  %v444 = vadd.f32 %v442, %v443
  %v445 = vrot.slane %v444, 2
  %v446 = vadd.f32 %v444, %v445
  %v447 = vrot.slane %v446, 1
  %v448 = vadd.f32 %v446, %v447
  %v449 = vadd.f32 %v434, %v435
  %v450 = vadd.f32 %v449, %v436
  %v451 = vadd.f32 %v450, %v437
  %v452 = vadd.f32 %v451, %v438
  %v453 = vrot.slane %v452, 4
  %v454 = vadd.f32 %v452, %v453
  %v455 = vrot.slane %v454, 2
  %v456 = vadd.f32 %v454, %v455
  %v457 = vrot.slane %v456, 1
  %v458 = vadd.f32 %v456, %v457
  %vm461 = vcmask 1041409
  %v462 = vsel %vm461, %v458, %v448
  %464 = vst [vmem:[%s5] sm:$0x3] %v462
  // Predicated region
  $region22: #{network_forward.1} parent=0 // pred_check
    _
  $region23: #{network_forward.1} parent=0 // pred_check_branch
    %466 = sbr.rel (0) target = $region25
  $region24: #{network_forward.1} parent=0 // pred_region
    _
  $region25: #{network_forward.1} parent=0 // pred_fallthru
    _
  // Predicated region
  $region26: #{network_forward.1} parent=0 // pred_check
    _
  $region27: #{network_forward.1} parent=0 // pred_check_branch
    %468 = sbr.rel (0) target = $region29
  $region28: #{network_forward.1} parent=0 // pred_region
    _
  $region29: #{network_forward.1} parent=0 // pred_fallthru
    _

</llo_original>
